<compile_context>
chip_gen: v5e
topology: v5e:2x2
jax: 0.10.0
libtpu: 0.0.40
codegen_flags: <defaults>
</compile_context>

<pallas_src>
import functools
import math

import jax
import jax.numpy as jnp
import numpy as np
from jax.experimental import pallas as pl
from jax.experimental.pallas import tpu as pltpu


def _view_attention_kernel(x_ref, wpre_ref, bpre_ref, wpost_ref,
                           s_sum_ref, s_max_ref, st_ref,
                           gamma_ref, beta_ref, o_ref, *, w, cw, apply_affine):
    """One batch tile: x_ref is (Bt, C*W); heads/positions live on lanes."""
    mm = wpre_ref.dtype                                   # bf16 MXU operands

    # fused conv1 + linear_0 (Kronecker-lifted):  (Bt, C*W) @ (C*W, mid*W)
    x = x_ref[...]
    logits = jnp.dot(x.astype(mm), wpre_ref[...],
                     preferred_element_type=jnp.float32) + bpre_ref[...]

    # --- overflow-safe softmax over each W-lane segment --------------------
    # Sliding-window max of width W (prefix doubling with lane rotations):
    # after the loop, the first lane of every segment holds that segment's
    # max (segments are W-aligned, so their windows never wrap).
    n = logits.shape[-1]
    wmax = logits
    win = 1
    while win < w:
        step = min(win, w - win)
        wmax = jnp.maximum(wmax, pltpu.roll(wmax, n - step, 1))
        win += step
    # Pick the segment-start lanes (constant 0/1 selection matrix) and
    # broadcast each segment's max back to all of its lanes.
    seg_max = jnp.dot(jnp.dot(wmax, s_max_ref[...],
                              preferred_element_type=jnp.float32),
                      st_ref[...], preferred_element_type=jnp.float32)
    e = jnp.exp(logits - seg_max)                          # <= 1, no overflow
    denom = jnp.dot(jnp.dot(e, s_sum_ref[...],
                            preferred_element_type=jnp.float32),
                    st_ref[...], preferred_element_type=jnp.float32)
    attn = e * pl.reciprocal(denom, approx=True)           # EUP slot, ~free

    # fused linear_1 + conv2[0] (Kronecker-lifted): (Bt, mid*W) @ (mid*W, C*W)
    z = jnp.dot(attn.astype(mm), wpost_ref[...],
                preferred_element_type=jnp.float32)

    # LayerNorm over (C, W) == all C*W lanes per row; single-pass moments.
    inv_cnt = 1.0 / cw
    mu = jnp.sum(z, axis=-1, keepdims=True) * inv_cnt
    ex2 = jnp.sum(z * z, axis=-1, keepdims=True) * inv_cnt
    var = jnp.maximum(ex2 - mu * mu, 0.0)
    zn = (z - mu) * jax.lax.rsqrt(var + 1e-5)
    if apply_affine:
        zn = zn * gamma_ref[...] + beta_ref[...]
    o_ref[...] = jnp.maximum(zn, 0.0).astype(o_ref.dtype)


def view_attention(x, w1, b1, wl1, w2, gamma=None, beta=None, *,
                   matmul_dtype=jnp.bfloat16, max_rows_per_step=512):
    """x: (B, C, W); w1,w2: (C,C); b1: (C,); wl1: (C, mid) (tied: W0 = wl1.T);
    gamma/beta: (C, W) LayerNorm affine (None => affine skipped)."""
    B, C, W = x.shape
    mid = wl1.shape[1]
    CW, NM = C * W, mid * W

    # ---- one-time weight fusion + Kronecker lift (wrapper, O(dim^2)) -------
    w0 = wl1.T                                              # tied linear_0
    wpre = (w0 @ w1).astype(jnp.float32)                    # (mid, C)
    bpre = (w0 @ b1).astype(jnp.float32)                    # (mid,)
    wpost = (w2 @ wl1).astype(jnp.float32)                  # (C, mid)

    eye_w = jnp.eye(W, dtype=jnp.float32)
    wpre_k = jnp.kron(wpre.T, eye_w).astype(matmul_dtype)   # (C*W, mid*W)
    wpost_k = jnp.kron(wpost.T, eye_w).astype(matmul_dtype)  # (mid*W, C*W)
    bpre_k = jnp.repeat(bpre, W).reshape(1, NM).astype(jnp.float32)

    # Constant 0/1 segment matrices (loaded once; resident across grid steps).
    eye_m = jnp.eye(mid, dtype=jnp.float32)
    s_sum = jnp.kron(eye_m, jnp.ones((W, 1), jnp.float32))   # (mid*W, mid)
    sel0 = jnp.zeros((W, 1), jnp.float32).at[0, 0].set(1.0)
    s_max = jnp.kron(eye_m, sel0)                            # (mid*W, mid)
    st = jnp.kron(eye_m, jnp.ones((1, W), jnp.float32))      # (mid, mid*W)

    apply_affine = (gamma is not None) or (beta is not None)
    g = jnp.ones((C, W), jnp.float32) if gamma is None else gamma
    bta = jnp.zeros((C, W), jnp.float32) if beta is None else beta
    gamma_f = g.astype(jnp.float32).reshape(1, CW)
    beta_f = bta.astype(jnp.float32).reshape(1, CW)

    # ---- batch tiling: free reshape only, no transposes --------------------
    x_flat = x.reshape(B, CW)                # row-major collapse: zero copies
    if B <= 2 * max_rows_per_step:
        bt, bq, b_pad = B, 1, B              # single step (v5e/v6e guidance;
        x_in = x_flat                        #  also avoids tiny v7x splits)
    else:
        bt = max_rows_per_step               # multiple of 8 -> legal block
        bq = -(-B // bt)
        b_pad = bq * bt
        x_in = jnp.pad(x_flat, ((0, b_pad - B), (0, 0)))

    def const_spec(shape):
        nd = len(shape)
        return pl.BlockSpec(shape, lambda i, _nd=nd: (0,) * _nd)

    kernel = functools.partial(_view_attention_kernel, w=W, cw=CW,
                               apply_affine=apply_affine)

    out_flat = pl.pallas_call(
        kernel,
        out_shape=jax.ShapeDtypeStruct((b_pad, CW), x.dtype),
        grid=(bq,),
        in_specs=[
            pl.BlockSpec((bt, CW), lambda i: (i, 0)),       # x batch tile
            const_spec(wpre_k.shape),                       # (C*W, mid*W) bf16
            const_spec(bpre_k.shape),                       # (1, mid*W)   f32
            const_spec(wpost_k.shape),                      # (mid*W, C*W) bf16
            const_spec(s_sum.shape),                        # (mid*W, mid)
            const_spec(s_max.shape),                        # (mid*W, mid)
            const_spec(st.shape),                           # (mid, mid*W)
            const_spec(gamma_f.shape),                      # (1, C*W)
            const_spec(beta_f.shape),                       # (1, C*W)
        ],
        out_specs=pl.BlockSpec((bt, CW), lambda i: (i, 0)),
        compiler_params=pltpu.CompilerParams(
            dimension_semantics=("parallel",)),
    )(x_in, wpre_k, bpre_k, wpost_k, s_sum, s_max, st, gamma_f, beta_f)

    return out_flat[:B].reshape(B, C, W)     # free reshape (+ tiny slice iff padded)


def reference(x, w1, b1, wl1, w2, gamma, beta):
    """Pure-f32 JAX reference matching the PyTorch forward."""
    w0 = wl1.T
    h = jnp.einsum("oc,bcw->bow", w1, x) + b1[None, :, None]
    a = jax.nn.softmax(jnp.einsum("mc,bcw->bmw", w0, h), axis=-1)
    y = jnp.einsum("cm,bmw->bcw", wl1, a)
    z = jnp.einsum("oc,bcw->bow", w2, y)
    mu = z.mean(axis=(1, 2), keepdims=True)
    var = z.var(axis=(1, 2), keepdims=True)
    zn = (z - mu) / jnp.sqrt(var + 1e-5)
    return jax.nn.relu(zn * gamma[None] + beta[None])


if __name__ == "__main__":
    # Small shapes consistent with the module (Spectral uses channel=1, dim=64;
    # we use C=4, dim=32 so the LayerNorm channel axis is non-trivial and
    # C*W = 128 lanes exactly — full-vreg, unmasked stores).
    B, C, D = 13, 4, 32          # batch, channels, dim (softmax axis)
    mid = D // 4

    key = jax.random.PRNGKey(0)
    kx, k1, kb, klin, k2, kg, kbt = jax.random.split(key, 7)

    # conv1: Conv1d(C, C, 1) weight ~ N(0, sqrt(2/C)), bias ~ small uniform
    w1 = jax.random.normal(k1, (C, C), jnp.float32) * math.sqrt(2.0 / C)
    b1 = (jax.random.uniform(kb, (C,), jnp.float32) - 0.5) * (2.0 / math.sqrt(C))
    # tied linear_0 / linear_1 (shared storage in the PyTorch module):
    wl1 = jax.random.normal(klin, (C, mid), jnp.float32) * math.sqrt(2.0 / C)
    # conv2[0]: Conv1d(C, C, 1, bias=False)
    w2 = jax.random.normal(k2, (C, C), jnp.float32) * math.sqrt(2.0 / C)
    # LayerNorm([C, D]) affine params (perturbed so the affine path is tested)
    gamma = 1.0 + 0.1 * jax.random.normal(kg, (C, D), jnp.float32)
    beta = 0.1 * jax.random.normal(kbt, (C, D), jnp.float32)

    x = jax.random.normal(kx, (B, C, D), jnp.float32)

    out = jax.block_until_ready(view_attention(x, w1, b1, wl1, w2, gamma, beta))
    ref = jax.block_until_ready(reference(x, w1, b1, wl1, w2, gamma, beta))

    # bf16 MXU operands (f32 accumulation) + the EUP approx reciprocal loosen
    # the match vs. the pure-f32 reference to the low 1e-2 range.
    np.testing.assert_allclose(np.asarray(out), np.asarray(ref),
                               rtol=3e-2, atol=3e-2)
    print("KERNEL_OK")
</pallas_src>

<mosaic_0001>
module attributes {stable_mosaic.version = 11 : i64} {
  func.func @_view_attention_kernel(%arg0: i32, %arg1: memref<13x128xf32, #tpu.memory_space<vmem>>, %arg2: memref<128x256xbf16, #tpu.memory_space<vmem>>, %arg3: memref<1x256xf32, #tpu.memory_space<vmem>>, %arg4: memref<256x128xbf16, #tpu.memory_space<vmem>>, %arg5: memref<256x8xf32, #tpu.memory_space<vmem>>, %arg6: memref<256x8xf32, #tpu.memory_space<vmem>>, %arg7: memref<8x256xf32, #tpu.memory_space<vmem>>, %arg8: memref<1x128xf32, #tpu.memory_space<vmem>>, %arg9: memref<1x128xf32, #tpu.memory_space<vmem>>, %arg10: memref<13x128xf32, #tpu.memory_space<vmem>>) attributes {dimension_semantics = [#tpu.dimension_semantics<parallel>], iteration_bounds = array<i64: 1>, scalar_prefetch = 0 : i64, scratch_operands = 0 : i64, tpu.core_type = #tpu.core_type<tc>, window_params = [{transform_indices = @transform_0, window_bounds = array<i64: 13, 128>}, {pipeline_mode = #tpu.pipeline_mode<synchronous>, transform_indices = @transform_1, window_bounds = array<i64: 128, 256>}, {pipeline_mode = #tpu.pipeline_mode<synchronous>, transform_indices = @transform_2, window_bounds = array<i64: 1, 256>}, {pipeline_mode = #tpu.pipeline_mode<synchronous>, transform_indices = @transform_3, window_bounds = array<i64: 256, 128>}, {pipeline_mode = #tpu.pipeline_mode<synchronous>, transform_indices = @transform_4, window_bounds = array<i64: 256, 8>}, {pipeline_mode = #tpu.pipeline_mode<synchronous>, transform_indices = @transform_5, window_bounds = array<i64: 256, 8>}, {pipeline_mode = #tpu.pipeline_mode<synchronous>, transform_indices = @transform_6, window_bounds = array<i64: 8, 256>}, {pipeline_mode = #tpu.pipeline_mode<synchronous>, transform_indices = @transform_7, window_bounds = array<i64: 1, 128>}, {pipeline_mode = #tpu.pipeline_mode<synchronous>, transform_indices = @transform_8, window_bounds = array<i64: 1, 128>}, {transform_indices = @transform_9, window_bounds = array<i64: 13, 128>}]} {
    %c0 = arith.constant 0 : index
    %c0_0 = arith.constant 0 : index
    %0 = vector.load %arg1[%c0, %c0_0] : memref<13x128xf32, #tpu.memory_space<vmem>>, vector<13x128xf32>
    %1 = arith.truncf %0 : vector<13x128xf32> to vector<13x128xbf16>
    %c0_1 = arith.constant 0 : index
    %c0_2 = arith.constant 0 : index
    %2 = vector.load %arg2[%c0_1, %c0_2] : memref<128x256xbf16, #tpu.memory_space<vmem>>, vector<128x256xbf16>
    %cst = arith.constant dense<0.000000e+00> : vector<13x256xf32>
    %3 = tpu.matmul %1, %2, %cst {dimension_numbers = #tpu.dot_dimension_numbers<[1], [0], [0], [1], [0, 0, 1, 1], [], []>} : vector<13x128xbf16>, vector<128x256xbf16>, vector<13x256xf32> -> vector<13x256xf32>
    %c0_3 = arith.constant 0 : index
    %c0_4 = arith.constant 0 : index
    %4 = vector.load %arg3[%c0_3, %c0_4] : memref<1x256xf32, #tpu.memory_space<vmem>>, vector<1x256xf32>
    %5 = vector.broadcast %4 : vector<1x256xf32> to vector<13x256xf32>
    %6 = arith.addf %3, %5 : vector<13x256xf32>
    %c255_i32 = arith.constant 255 : i32
    %7 = tpu.dynamic_rotate %6 by %c255_i32 dim 1 : vector<13x256xf32>, i32 -> vector<13x256xf32>
    %8 = arith.maximumf %6, %7 : vector<13x256xf32>
    %c254_i32 = arith.constant 254 : i32
    %9 = tpu.dynamic_rotate %8 by %c254_i32 dim 1 : vector<13x256xf32>, i32 -> vector<13x256xf32>
    %10 = arith.maximumf %8, %9 : vector<13x256xf32>
    %c252_i32 = arith.constant 252 : i32
    %11 = tpu.dynamic_rotate %10 by %c252_i32 dim 1 : vector<13x256xf32>, i32 -> vector<13x256xf32>
    %12 = arith.maximumf %10, %11 : vector<13x256xf32>
    %c248_i32 = arith.constant 248 : i32
    %13 = tpu.dynamic_rotate %12 by %c248_i32 dim 1 : vector<13x256xf32>, i32 -> vector<13x256xf32>
    %14 = arith.maximumf %12, %13 : vector<13x256xf32>
    %c240_i32 = arith.constant 240 : i32
    %15 = tpu.dynamic_rotate %14 by %c240_i32 dim 1 : vector<13x256xf32>, i32 -> vector<13x256xf32>
    %16 = arith.maximumf %14, %15 : vector<13x256xf32>
    %c0_5 = arith.constant 0 : index
    %c0_6 = arith.constant 0 : index
    %17 = vector.load %arg6[%c0_5, %c0_6] : memref<256x8xf32, #tpu.memory_space<vmem>>, vector<256x8xf32>
    %cst_7 = arith.constant dense<0.000000e+00> : vector<13x8xf32>
    %18 = tpu.matmul %16, %17, %cst_7 {dimension_numbers = #tpu.dot_dimension_numbers<[1], [0], [0], [1], [0, 0, 1, 1], [], []>} : vector<13x256xf32>, vector<256x8xf32>, vector<13x8xf32> -> vector<13x8xf32>
    %c0_8 = arith.constant 0 : index
    %c0_9 = arith.constant 0 : index
    %19 = vector.load %arg7[%c0_8, %c0_9] : memref<8x256xf32, #tpu.memory_space<vmem>>, vector<8x256xf32>
    %cst_10 = arith.constant dense<0.000000e+00> : vector<13x256xf32>
    %20 = tpu.matmul %18, %19, %cst_10 {dimension_numbers = #tpu.dot_dimension_numbers<[1], [0], [0], [1], [0, 0, 1, 1], [], []>} : vector<13x8xf32>, vector<8x256xf32>, vector<13x256xf32> -> vector<13x256xf32>
    %21 = arith.subf %6, %20 : vector<13x256xf32>
    %22 = math.exp %21 : vector<13x256xf32>
    %c0_11 = arith.constant 0 : index
    %c0_12 = arith.constant 0 : index
    %23 = vector.load %arg5[%c0_11, %c0_12] : memref<256x8xf32, #tpu.memory_space<vmem>>, vector<256x8xf32>
    %cst_13 = arith.constant dense<0.000000e+00> : vector<13x8xf32>
    %24 = tpu.matmul %22, %23, %cst_13 {dimension_numbers = #tpu.dot_dimension_numbers<[1], [0], [0], [1], [0, 0, 1, 1], [], []>} : vector<13x256xf32>, vector<256x8xf32>, vector<13x8xf32> -> vector<13x8xf32>
    %c0_14 = arith.constant 0 : index
    %c0_15 = arith.constant 0 : index
    %25 = vector.load %arg7[%c0_14, %c0_15] : memref<8x256xf32, #tpu.memory_space<vmem>>, vector<8x256xf32>
    %cst_16 = arith.constant dense<0.000000e+00> : vector<13x256xf32>
    %26 = tpu.matmul %24, %25, %cst_16 {dimension_numbers = #tpu.dot_dimension_numbers<[1], [0], [0], [1], [0, 0, 1, 1], [], []>} : vector<13x8xf32>, vector<8x256xf32>, vector<13x256xf32> -> vector<13x256xf32>
    %27 = tpu.reciprocal %26 {approx = true} : vector<13x256xf32> -> vector<13x256xf32>
    %28 = arith.mulf %22, %27 : vector<13x256xf32>
    %29 = arith.truncf %28 : vector<13x256xf32> to vector<13x256xbf16>
    %c0_17 = arith.constant 0 : index
    %c0_18 = arith.constant 0 : index
    %30 = vector.load %arg4[%c0_17, %c0_18] : memref<256x128xbf16, #tpu.memory_space<vmem>>, vector<256x128xbf16>
    %cst_19 = arith.constant dense<0.000000e+00> : vector<13x128xf32>
    %31 = tpu.matmul %29, %30, %cst_19 {dimension_numbers = #tpu.dot_dimension_numbers<[1], [0], [0], [1], [0, 0, 1, 1], [], []>} : vector<13x256xbf16>, vector<256x128xbf16>, vector<13x128xf32> -> vector<13x128xf32>
    %cst_20 = arith.constant dense<0.000000e+00> : vector<13xf32>
    %32 = vector.multi_reduction <add>, %31, %cst_20 [1] : vector<13x128xf32> to vector<13xf32>
    %33 = vector.shape_cast %32 : vector<13xf32> to vector<13x1xf32>
    %cst_21 = arith.constant 7.812500e-03 : f32
    %34 = vector.broadcast %cst_21 : f32 to vector<13x1xf32>
    %35 = arith.mulf %33, %34 : vector<13x1xf32>
    %36 = arith.mulf %31, %31 : vector<13x128xf32>
    %cst_22 = arith.constant dense<0.000000e+00> : vector<13xf32>
    %37 = vector.multi_reduction <add>, %36, %cst_22 [1] : vector<13x128xf32> to vector<13xf32>
    %38 = vector.shape_cast %37 : vector<13xf32> to vector<13x1xf32>
    %cst_23 = arith.constant 7.812500e-03 : f32
    %39 = vector.broadcast %cst_23 : f32 to vector<13x1xf32>
    %40 = arith.mulf %38, %39 : vector<13x1xf32>
    %41 = arith.mulf %35, %35 : vector<13x1xf32>
    %42 = arith.subf %40, %41 : vector<13x1xf32>
    %cst_24 = arith.constant 0.000000e+00 : f32
    %43 = vector.broadcast %cst_24 : f32 to vector<13x1xf32>
    %44 = arith.maximumf %42, %43 : vector<13x1xf32>
    %45 = vector.broadcast %35 : vector<13x1xf32> to vector<13x128xf32>
    %46 = arith.subf %31, %45 : vector<13x128xf32>
    %cst_25 = arith.constant 9.99999974E-6 : f32
    %47 = vector.broadcast %cst_25 : f32 to vector<13x1xf32>
    %48 = arith.addf %44, %47 : vector<13x1xf32>
    %49 = math.rsqrt %48 : vector<13x1xf32>
    %50 = vector.broadcast %49 : vector<13x1xf32> to vector<13x128xf32>
    %51 = arith.mulf %46, %50 : vector<13x128xf32>
    %c0_26 = arith.constant 0 : index
    %c0_27 = arith.constant 0 : index
    %52 = vector.load %arg8[%c0_26, %c0_27] : memref<1x128xf32, #tpu.memory_space<vmem>>, vector<1x128xf32>
    %53 = vector.broadcast %52 : vector<1x128xf32> to vector<13x128xf32>
    %54 = arith.mulf %51, %53 : vector<13x128xf32>
    %c0_28 = arith.constant 0 : index
    %c0_29 = arith.constant 0 : index
    %55 = vector.load %arg9[%c0_28, %c0_29] : memref<1x128xf32, #tpu.memory_space<vmem>>, vector<1x128xf32>
    %56 = vector.broadcast %55 : vector<1x128xf32> to vector<13x128xf32>
    %57 = arith.addf %54, %56 : vector<13x128xf32>
    %cst_30 = arith.constant 0.000000e+00 : f32
    %58 = vector.broadcast %cst_30 : f32 to vector<13x128xf32>
    %59 = arith.maximumf %57, %58 : vector<13x128xf32>
    %c0_31 = arith.constant 0 : index
    %c0_32 = arith.constant 0 : index
    %60 = vector.load %arg10[%c0_31, %c0_32] : memref<13x128xf32, #tpu.memory_space<vmem>>, vector<13x128xf32>
    tpu.vector_store %arg10[%c0_31, %c0_32], %59 {strides = array<i32>} : memref<13x128xf32, #tpu.memory_space<vmem>>, vector<13x128xf32>,
    return
  }
  func.func @transform_0(%arg0: i32) -> (i32, i32) {
    %c0_i32 = arith.constant 0 : i32
    %c0_i32_0 = arith.constant 0 : i32
    return %arg0, %c0_i32 : i32, i32
  }
  func.func @transform_1(%arg0: i32) -> (i32, i32) {
    %c0_i32 = arith.constant 0 : i32
    %c0_i32_0 = arith.constant 0 : i32
    %c0_i32_1 = arith.constant 0 : i32
    return %c0_i32, %c0_i32_0 : i32, i32
  }
  func.func @transform_2(%arg0: i32) -> (i32, i32) {
    %c0_i32 = arith.constant 0 : i32
    %c0_i32_0 = arith.constant 0 : i32
    %c0_i32_1 = arith.constant 0 : i32
    return %c0_i32, %c0_i32_0 : i32, i32
  }
  func.func @transform_3(%arg0: i32) -> (i32, i32) {
    %c0_i32 = arith.constant 0 : i32
    %c0_i32_0 = arith.constant 0 : i32
    %c0_i32_1 = arith.constant 0 : i32
    return %c0_i32, %c0_i32_0 : i32, i32
  }
  func.func @transform_4(%arg0: i32) -> (i32, i32) {
    %c0_i32 = arith.constant 0 : i32
    %c0_i32_0 = arith.constant 0 : i32
    %c0_i32_1 = arith.constant 0 : i32
    return %c0_i32, %c0_i32_0 : i32, i32
  }
  func.func @transform_5(%arg0: i32) -> (i32, i32) {
    %c0_i32 = arith.constant 0 : i32
    %c0_i32_0 = arith.constant 0 : i32
    %c0_i32_1 = arith.constant 0 : i32
    return %c0_i32, %c0_i32_0 : i32, i32
  }
  func.func @transform_6(%arg0: i32) -> (i32, i32) {
    %c0_i32 = arith.constant 0 : i32
    %c0_i32_0 = arith.constant 0 : i32
    %c0_i32_1 = arith.constant 0 : i32
    return %c0_i32, %c0_i32_0 : i32, i32
  }
  func.func @transform_7(%arg0: i32) -> (i32, i32) {
    %c0_i32 = arith.constant 0 : i32
    %c0_i32_0 = arith.constant 0 : i32
    %c0_i32_1 = arith.constant 0 : i32
    return %c0_i32, %c0_i32_0 : i32, i32
  }
  func.func @transform_8(%arg0: i32) -> (i32, i32) {
    %c0_i32 = arith.constant 0 : i32
    %c0_i32_0 = arith.constant 0 : i32
    %c0_i32_1 = arith.constant 0 : i32
    return %c0_i32, %c0_i32_0 : i32, i32
  }
  func.func @transform_9(%arg0: i32) -> (i32, i32) {
    %c0_i32 = arith.constant 0 : i32
    %c0_i32_0 = arith.constant 0 : i32
    return %arg0, %c0_i32 : i32, i32
  }
}

</mosaic_0001>

<llo_original>
// kernel: tpu_custom_call.1
$region0: #{tpu_custom_call.1}
  #allocation0 [shape = 'u32[]', space=smem, size = 0x4, offset = 0x4, fixed_abs, tag = 'smem constant byte address 0x4 - core index']
  #allocation1 [shape = 'u32[72,128]{1,0:T(1,128)}', space=vmem, size = 0x9000, scoped, tag = 'internal scratch']
  %s0 = inlined_call_operand.vmem [shape: f32[13,128], index: 0, kind: input, shape index: {}]
  %s1 = inlined_call_operand.vmem [shape: bf16[128,256], index: 1, kind: input, shape index: {}]
  %s2 = inlined_call_operand.vmem [shape: f32[1,256], index: 2, kind: input, shape index: {}]
  %s3 = inlined_call_operand.vmem [shape: bf16[256,128], index: 3, kind: input, shape index: {}]
  %s4 = inlined_call_operand.vmem [shape: f32[256,8], index: 4, kind: input, shape index: {}]
  %s5 = inlined_call_operand.vmem [shape: f32[256,8], index: 5, kind: input, shape index: {}]
  %s6 = inlined_call_operand.vmem [shape: f32[8,256], index: 6, kind: input, shape index: {}]
  %s7 = inlined_call_operand.vmem [shape: f32[1,128], index: 7, kind: input, shape index: {}]
  %s8 = inlined_call_operand.vmem [shape: f32[1,128], index: 8, kind: input, shape index: {}]
  %s9 = inlined_call_operand.hbm [shape: f32[13,128], index: 9, kind: output, shape index: {}]
  %s10 = sld [smem:[#allocation0]]
  $region46: #{tpu_custom_call.1} parent=0
    _
  %s12 = ssub.s32 1, %s10
  %s13 = scalar_select 0, %s12, %s10
  $region1: #{tpu_custom_call.1} parent=0
    #allocation2 [shape = 'u8[8192]{0}', space=vmem, size = 0x2000, scoped, tag = 'output window, operand 0, single buffered']
    #allocation3 [shape = 's32[1]{0}', space=sflag, size = 0x4, scoped, tag = 'scoped memory for tpu_custom_call.1']
    %14 = vsyncpa [#allocation3], 0
    // Predicated region
    $region2: #{tpu_custom_call.1} parent=1 // pred_check
      _
    $region3: #{tpu_custom_call.1} parent=1 // pred_check_branch
      %16 = sbr.rel (0) target = $region5
    $region4: #{tpu_custom_call.1} parent=1 // pred_region
      _
    $region5: #{tpu_custom_call.1} parent=1 // pred_fallthru
      _
    // Predicated region
    $region6: #{tpu_custom_call.1} parent=1 // pred_check
      _
    $region7: #{tpu_custom_call.1} parent=1 // pred_check_branch
      %18 = sbr.rel (0) target = $region9
    $region8: #{tpu_custom_call.1} parent=1 // pred_region
      _
    $region9: #{tpu_custom_call.1} parent=1 // pred_fallthru
      _
    // Predicated region
    $region10: #{tpu_custom_call.1} parent=1 // pred_check
      _
    $region11: #{tpu_custom_call.1} parent=1 // pred_check_branch
      %20 = sbr.rel (0) target = $region13
    $region12: #{tpu_custom_call.1} parent=1 // pred_region
      _
    $region13: #{tpu_custom_call.1} parent=1 // pred_fallthru
      _
    // Predicated region
    $region14: #{tpu_custom_call.1} parent=1 // pred_check
      _
    $region15: #{tpu_custom_call.1} parent=1 // pred_check_branch
      %22 = sbr.rel (0) target = $region17
    $region16: #{tpu_custom_call.1} parent=1 // pred_region
      _
    $region17: #{tpu_custom_call.1} parent=1 // pred_fallthru
      _
    // Predicated region
    $region18: #{tpu_custom_call.1} parent=1 // pred_check
      _
    $region19: #{tpu_custom_call.1} parent=1 // pred_check_branch
      %24 = sbr.rel (0) target = $region21
    $region20: #{tpu_custom_call.1} parent=1 // pred_region
      _
    $region21: #{tpu_custom_call.1} parent=1 // pred_fallthru
      _
    // Predicated region
    $region22: #{tpu_custom_call.1} parent=1 // pred_check
      _
    $region23: #{tpu_custom_call.1} parent=1 // pred_check_branch
      %26 = sbr.rel (0) target = $region25
    $region24: #{tpu_custom_call.1} parent=1 // pred_region
      _
    $region25: #{tpu_custom_call.1} parent=1 // pred_fallthru
      _
    // Predicated region
    $region26: #{tpu_custom_call.1} parent=1 // pred_check
      _
    $region27: #{tpu_custom_call.1} parent=1 // pred_check_branch
      %28 = sbr.rel (0) target = $region29
    $region28: #{tpu_custom_call.1} parent=1 // pred_region
      _
    $region29: #{tpu_custom_call.1} parent=1 // pred_fallthru
      _
    // Predicated region
    $region30: #{tpu_custom_call.1} parent=1 // pred_check
      _
    $region31: #{tpu_custom_call.1} parent=1 // pred_check_branch
      %30 = sbr.rel (0) target = $region33
    $region32: #{tpu_custom_call.1} parent=1 // pred_region
      _
    $region33: #{tpu_custom_call.1} parent=1 // pred_fallthru
      _
    // Predicated region
    $region34: #{tpu_custom_call.1} parent=1 // pred_check
      _
    $region35: #{tpu_custom_call.1} parent=1 // pred_check_branch
      %32 = sbr.rel (0) target = $region37
    $region36: #{tpu_custom_call.1} parent=1 // pred_region
      _
    $region37: #{tpu_custom_call.1} parent=1 // pred_fallthru
      _
    %v33 = vld [vmem:[%s0] sm:$0xff]
    %v34 = vld [vmem:[%s0 + $0x8] sm:$0x1f]
    %v35 = vpack.c.bf16 %v34, %v33
    %v36 = vld [vmem:[%s1] sm:$0xff]
    %v37 = vld [vmem:[%s1 + $0x8] sm:$0xff]
    %v38 = vld [vmem:[%s1 + $0x10] sm:$0xff]
    %v39 = vld [vmem:[%s1 + $0x18] sm:$0xff]
    %v40 = vld [vmem:[%s1 + $0x20] sm:$0xff]
    %v41 = vld [vmem:[%s1 + $0x28] sm:$0xff]
    %v42 = vld [vmem:[%s1 + $0x30] sm:$0xff]
    %v43 = vld [vmem:[%s1 + $0x38] sm:$0xff]
    %v44 = vld [vmem:[%s1 + $0x40] sm:$0xff]
    %v45 = vld [vmem:[%s1 + $0x48] sm:$0xff]
    %v46 = vld [vmem:[%s1 + $0x50] sm:$0xff]
    %v47 = vld [vmem:[%s1 + $0x58] sm:$0xff]
    %v48 = vld [vmem:[%s1 + $0x60] sm:$0xff]
    %v49 = vld [vmem:[%s1 + $0x68] sm:$0xff]
    %v50 = vld [vmem:[%s1 + $0x70] sm:$0xff]
    %v51 = vld [vmem:[%s1 + $0x78] sm:$0xff]
    %v52 = vld [vmem:[%s2] sm:$0x3]
    %v54 = vperm.slane %v52, 0
    %v55 = vperm.slane %v52, 1
    %v74 = vunpack.c.l.b16 %v36
    %v75 = vunpack.c.h.b16 %v36
    %v76 = vunpack.c.l.b16 %v37
    %v77 = vunpack.c.h.b16 %v37
    %v78 = vunpack.c.l.b16 %v38
    %v79 = vunpack.c.h.b16 %v38
    %v80 = vunpack.c.l.b16 %v39
    %v81 = vunpack.c.h.b16 %v39
    %v82 = vunpack.c.l.b16 %v40
    %v83 = vunpack.c.h.b16 %v40
    %v84 = vunpack.c.l.b16 %v41
    %v85 = vunpack.c.h.b16 %v41
    %v86 = vunpack.c.l.b16 %v42
    %v87 = vunpack.c.h.b16 %v42
    %v88 = vunpack.c.l.b16 %v43
    %v89 = vunpack.c.h.b16 %v43
    %v90 = vunpack.c.l.b16 %v44
    %v91 = vunpack.c.h.b16 %v44
    %v92 = vunpack.c.l.b16 %v45
    %v93 = vunpack.c.h.b16 %v45
    %v94 = vunpack.c.l.b16 %v46
    %v95 = vunpack.c.h.b16 %v46
    %v96 = vunpack.c.l.b16 %v47
    %v97 = vunpack.c.h.b16 %v47
    %v98 = vunpack.c.l.b16 %v48
    %v99 = vunpack.c.h.b16 %v48
    %v100 = vunpack.c.l.b16 %v49
    %v101 = vunpack.c.h.b16 %v49
    %v102 = vunpack.c.l.b16 %v50
    %v103 = vunpack.c.h.b16 %v50
    %v104 = vunpack.c.l.b16 %v51
    %v105 = vunpack.c.h.b16 %v51
    %v106 = vpack.c.b16 %v76, %v74
    %v107 = vpack.c.b16 %v77, %v75
    %v108 = vpack.c.b16 %v80, %v78
    %v109 = vpack.c.b16 %v81, %v79
    %v110 = vpack.c.b16 %v84, %v82
    %v111 = vpack.c.b16 %v85, %v83
    %v112 = vpack.c.b16 %v88, %v86
    %v113 = vpack.c.b16 %v89, %v87
    %v114 = vpack.c.b16 %v92, %v90
    %v115 = vpack.c.b16 %v93, %v91
    %v116 = vpack.c.b16 %v96, %v94
    %v117 = vpack.c.b16 %v97, %v95
    %v118 = vpack.c.b16 %v100, %v98
    %v119 = vpack.c.b16 %v101, %v99
    %v120 = vpack.c.b16 %v104, %v102
    %v121 = vpack.c.b16 %v105, %v103
    %138 = vmatpush.bf16.msra.mxu0 %v120
    %139 = vmatpush.bf16.msra.mxu0 %v118
    %140 = vmatpush.bf16.msra.mxu0 %v116
    %141 = vmatpush.bf16.msra.mxu0 %v114
    %142 = vmatpush.bf16.msra.mxu0 %v112
    %143 = vmatpush.bf16.msra.mxu0 %v110
    %144 = vmatpush.bf16.msra.mxu0 %v108
    %145 = vmatpush.bf16.msra.mxu0 %v106
    %146 = vmatmul.bf16.gmra.mxu0 %v35
    %v147 = vpop.f32.mrf.mxu0
    %v148 = vadd.f32 %v54, %v147
    %v149 = vpop.f32.mrf.mxu0
    %v150 = vadd.f32 %v54, %v149
    %151 = vdwg.mxu0
    %152 = vmatpush.bf16.msra.mxu0 %v121
    %153 = vmatpush.bf16.msra.mxu0 %v119
    %154 = vmatpush.bf16.msra.mxu0 %v117
    %155 = vmatpush.bf16.msra.mxu0 %v115
    %156 = vmatpush.bf16.msra.mxu0 %v113
    %157 = vmatpush.bf16.msra.mxu0 %v111
    %158 = vmatpush.bf16.msra.mxu0 %v109
    %159 = vmatpush.bf16.msra.mxu0 %v107
    %160 = vmatmul.bf16.gmra.mxu0 %v35
    %v161 = vpop.f32.mrf.mxu0
    %v162 = vadd.f32 %v55, %v161
    %v163 = vpop.f32.mrf.mxu0
    %v164 = vadd.f32 %v55, %v163
    %165 = vdwg.mxu0
    %166 = vrot.lane.b32.xlu0 %v148, 127
    %v167 = vpop.permute.xlu0 %166
    %168 = vrot.lane.b32.xlu0 %v150, 127
    %v169 = vpop.permute.xlu0 %168
    %170 = vrot.lane.b32.xlu0 %v162, 127
    %v171 = vpop.permute.xlu0 %170
    %172 = vrot.lane.b32.xlu0 %v164, 127
    %v173 = vpop.permute.xlu0 %172
    %v174 = vlaneseq
    %v175 = vand.u32 %v174, 127
    %vm176 = vcmp.lt.s32.totalorder %v175, 127
    %v177 = vsel %vm176, %v167, %v171
    %v178 = vsel %vm176, %v169, %v173
    %v179 = vsel %vm176, %v171, %v167
    %v180 = vsel %vm176, %v173, %v169
    %v181 = vmax.f32 %v148, %v177
    %v182 = vmax.f32 %v162, %v179
    %v183 = vmax.f32 %v150, %v178
    %v184 = vmax.f32 %v164, %v180
    %185 = vrot.lane.b32.xlu0 %v181, 126
    %v186 = vpop.permute.xlu0 %185
    %187 = vrot.lane.b32.xlu0 %v183, 126
    %v188 = vpop.permute.xlu0 %187
    %189 = vrot.lane.b32.xlu0 %v182, 126
    %v190 = vpop.permute.xlu0 %189
    %191 = vrot.lane.b32.xlu0 %v184, 126
    %v192 = vpop.permute.xlu0 %191
    %vm193 = vcmp.lt.s32.totalorder %v175, 126
    %v194 = vsel %vm193, %v186, %v190
    %v195 = vsel %vm193, %v188, %v192
    %v196 = vsel %vm193, %v190, %v186
    %v197 = vsel %vm193, %v192, %v188
    %v198 = vmax.f32 %v181, %v194
    %v199 = vmax.f32 %v182, %v196
    %v200 = vmax.f32 %v183, %v195
    %v201 = vmax.f32 %v184, %v197
    %202 = vrot.lane.b32.xlu0 %v198, 124
    %v203 = vpop.permute.xlu0 %202
    %204 = vrot.lane.b32.xlu0 %v200, 124
    %v205 = vpop.permute.xlu0 %204
    %206 = vrot.lane.b32.xlu0 %v199, 124
    %v207 = vpop.permute.xlu0 %206
    %208 = vrot.lane.b32.xlu0 %v201, 124
    %v209 = vpop.permute.xlu0 %208
    %vm210 = vcmp.lt.s32.totalorder %v175, 124
    %v211 = vsel %vm210, %v203, %v207
    %v212 = vsel %vm210, %v205, %v209
    %v213 = vsel %vm210, %v207, %v203
    %v214 = vsel %vm210, %v209, %v205
    %v215 = vmax.f32 %v198, %v211
    %v216 = vmax.f32 %v199, %v213
    %v217 = vmax.f32 %v200, %v212
    %v218 = vmax.f32 %v201, %v214
    %219 = vrot.lane.b32.xlu0 %v215, 120
    %v220 = vpop.permute.xlu0 %219
    %221 = vrot.lane.b32.xlu0 %v217, 120
    %v222 = vpop.permute.xlu0 %221
    %223 = vrot.lane.b32.xlu0 %v216, 120
    %v224 = vpop.permute.xlu0 %223
    %225 = vrot.lane.b32.xlu0 %v218, 120
    %v226 = vpop.permute.xlu0 %225
    %vm227 = vcmp.lt.s32.totalorder %v175, 120
    %v228 = vsel %vm227, %v220, %v224
    %v229 = vsel %vm227, %v222, %v226
    %v230 = vsel %vm227, %v224, %v220
    %v231 = vsel %vm227, %v226, %v222
    %v232 = vmax.f32 %v215, %v228
    %v233 = vmax.f32 %v216, %v230
    %v234 = vmax.f32 %v217, %v229
    %v235 = vmax.f32 %v218, %v231
    %236 = vrot.lane.b32.xlu0 %v232, 112
    %v237 = vpop.permute.xlu0 %236
    %238 = vrot.lane.b32.xlu0 %v234, 112
    %v239 = vpop.permute.xlu0 %238
    %240 = vrot.lane.b32.xlu0 %v233, 112
    %v241 = vpop.permute.xlu0 %240
    %242 = vrot.lane.b32.xlu0 %v235, 112
    %v243 = vpop.permute.xlu0 %242
    %vm244 = vcmp.lt.s32.totalorder %v175, 112
    %v245 = vsel %vm244, %v237, %v241
    %v246 = vsel %vm244, %v239, %v243
    %v247 = vsel %vm244, %v241, %v237
    %v248 = vsel %vm244, %v243, %v239
    %v249 = vmax.f32 %v232, %v245
    %v250 = vmax.f32 %v233, %v247
    %v251 = vmax.f32 %v234, %v246
    %v252 = vmax.f32 %v235, %v248
    %v253 = vld [vmem:[%s5] sm:$0xff]
    %v254 = vld [vmem:[%s5 + $0x8] sm:$0xff]
    %v255 = vld [vmem:[%s5 + $0x10] sm:$0xff]
    %v256 = vld [vmem:[%s5 + $0x18] sm:$0xff]
    %v257 = vld [vmem:[%s5 + $0x20] sm:$0xff]
    %v258 = vld [vmem:[%s5 + $0x28] sm:$0xff]
    %v259 = vld [vmem:[%s5 + $0x30] sm:$0xff]
    %v260 = vld [vmem:[%s5 + $0x38] sm:$0xff]
    %v261 = vld [vmem:[%s5 + $0x40] sm:$0xff]
    %v262 = vld [vmem:[%s5 + $0x48] sm:$0xff]
    %v263 = vld [vmem:[%s5 + $0x50] sm:$0xff]
    %v264 = vld [vmem:[%s5 + $0x58] sm:$0xff]
    %v265 = vld [vmem:[%s5 + $0x60] sm:$0xff]
    %v266 = vld [vmem:[%s5 + $0x68] sm:$0xff]
    %v267 = vld [vmem:[%s5 + $0x70] sm:$0xff]
    %v268 = vld [vmem:[%s5 + $0x78] sm:$0xff]
    %v269 = vld [vmem:[%s5 + $0x80] sm:$0xff]
    %v270 = vld [vmem:[%s5 + $0x88] sm:$0xff]
    %v271 = vld [vmem:[%s5 + $0x90] sm:$0xff]
    %v272 = vld [vmem:[%s5 + $0x98] sm:$0xff]
    %v273 = vld [vmem:[%s5 + $0xa0] sm:$0xff]
    %v274 = vld [vmem:[%s5 + $0xa8] sm:$0xff]
    %v275 = vld [vmem:[%s5 + $0xb0] sm:$0xff]
    %v276 = vld [vmem:[%s5 + $0xb8] sm:$0xff]
    %v277 = vld [vmem:[%s5 + $0xc0] sm:$0xff]
    %v278 = vld [vmem:[%s5 + $0xc8] sm:$0xff]
    %v279 = vld [vmem:[%s5 + $0xd0] sm:$0xff]
    %v280 = vld [vmem:[%s5 + $0xd8] sm:$0xff]
    %v281 = vld [vmem:[%s5 + $0xe0] sm:$0xff]
    %v282 = vld [vmem:[%s5 + $0xe8] sm:$0xff]
    %v283 = vld [vmem:[%s5 + $0xf0] sm:$0xff]
    %v284 = vld [vmem:[%s5 + $0xf8] sm:$0xff]
    %285 = vmatpush.msra.mxu0 %v268
    %286 = vmatpush.msra.mxu0 %v267
    %287 = vmatpush.msra.mxu0 %v266
    %288 = vmatpush.msra.mxu0 %v265
    %289 = vmatpush.msra.mxu0 %v264
    %290 = vmatpush.msra.mxu0 %v263
    %291 = vmatpush.msra.mxu0 %v262
    %292 = vmatpush.msra.mxu0 %v261
    %293 = vmatpush.msra.mxu0 %v260
    %294 = vmatpush.msra.mxu0 %v259
    %295 = vmatpush.msra.mxu0 %v258
    %296 = vmatpush.msra.mxu0 %v257
    %297 = vmatpush.msra.mxu0 %v256
    %298 = vmatpush.msra.mxu0 %v255
    %299 = vmatpush.msra.mxu0 %v254
    %300 = vmatpush.msra.mxu0 %v253
    %301 = vmatmul.f32.gmra.mxu0 %v249
    %v302 = vpop.f32.mrf.mxu0
    %v303 = vadd.f32 0.0, %v302
    %304 = vmatmul.f32.gmra.mxu0 %v251
    %v305 = vpop.f32.mrf.mxu0
    %v306 = vadd.f32 0.0, %v305
    %307 = vdwg.mxu0
    %308 = vmatpush.msra.mxu0 %v284
    %309 = vmatpush.msra.mxu0 %v283
    %310 = vmatpush.msra.mxu0 %v282
    %311 = vmatpush.msra.mxu0 %v281
    %312 = vmatpush.msra.mxu0 %v280
    %313 = vmatpush.msra.mxu0 %v279
    %314 = vmatpush.msra.mxu0 %v278
    %315 = vmatpush.msra.mxu0 %v277
    %316 = vmatpush.msra.mxu0 %v276
    %317 = vmatpush.msra.mxu0 %v275
    %318 = vmatpush.msra.mxu0 %v274
    %319 = vmatpush.msra.mxu0 %v273
    %320 = vmatpush.msra.mxu0 %v272
    %321 = vmatpush.msra.mxu0 %v271
    %322 = vmatpush.msra.mxu0 %v270
    %323 = vmatpush.msra.mxu0 %v269
    %324 = vmatmul.f32.gmra.mxu0 %v250
    %v325 = vpop.f32.mrf.mxu0
    %v326 = vadd.f32 %v303, %v325
    %327 = vmatmul.f32.gmra.mxu0 %v252
    %v328 = vpop.f32.mrf.mxu0
    %v329 = vadd.f32 %v306, %v328
    %330 = vdwg.mxu0
    %v331 = vld [vmem:[%s6] sm:$0xff]
    %v332 = vld [vmem:[%s6 + $0x8] sm:$0xff]
    %vm333 = vcmask 64512
    %v335 = vsel %vm333, %v326, 0
    %v338 = vsel %vm333, %v329, 0
    %340 = vmatpush.msra.mxu0 0.0
    %341 = vmatpush.msra.mxu0 0.0
    %342 = vmatpush.msra.mxu0 0.0
    %343 = vmatpush.msra.mxu0 0.0
    %344 = vmatpush.msra.mxu0 0.0
    %345 = vmatpush.msra.mxu0 0.0
    %346 = vmatpush.msra.mxu0 0.0
    %347 = vmatpush.msra.mxu0 0.0
    %348 = vmatpush.msra.mxu0 0.0
    %349 = vmatpush.msra.mxu0 0.0
    %350 = vmatpush.msra.mxu0 0.0
    %351 = vmatpush.msra.mxu0 0.0
    %352 = vmatpush.msra.mxu0 0.0
    %353 = vmatpush.msra.mxu0 0.0
    %354 = vmatpush.msra.mxu0 0.0
    %355 = vmatpush.msra.mxu0 %v331
    %356 = vmatmul.f32.gmra.mxu0 %v335
    %v357 = vpop.f32.mrf.mxu0
    %v358 = vadd.f32 0.0, %v357
    %359 = vmatmul.f32.gmra.mxu0 %v338
    %v360 = vpop.f32.mrf.mxu0
    %v361 = vadd.f32 0.0, %v360
    %362 = vdwg.mxu0
    %363 = vmatpush.msra.mxu0 0.0
    %364 = vmatpush.msra.mxu0 0.0
    %365 = vmatpush.msra.mxu0 0.0
    %366 = vmatpush.msra.mxu0 0.0
    %367 = vmatpush.msra.mxu0 0.0
    %368 = vmatpush.msra.mxu0 0.0
    %369 = vmatpush.msra.mxu0 0.0
    %370 = vmatpush.msra.mxu0 0.0
    %371 = vmatpush.msra.mxu0 0.0
    %372 = vmatpush.msra.mxu0 0.0
    %373 = vmatpush.msra.mxu0 0.0
    %374 = vmatpush.msra.mxu0 0.0
    %375 = vmatpush.msra.mxu0 0.0
    %376 = vmatpush.msra.mxu0 0.0
    %377 = vmatpush.msra.mxu0 0.0
    %378 = vmatpush.msra.mxu0 %v332
    %379 = vmatmul.f32.gmra.mxu0 %v335
    %v380 = vpop.f32.mrf.mxu0
    %v381 = vadd.f32 0.0, %v380
    %382 = vmatmul.f32.gmra.mxu0 %v338
    %v383 = vpop.f32.mrf.mxu0
    %v384 = vadd.f32 0.0, %v383
    %385 = vdwg.mxu0
    %v386 = vsub.f32 %v148, %v358
    %v387 = vsub.f32 %v162, %v381
    %v388 = vsub.f32 %v150, %v361
    %v389 = vsub.f32 %v164, %v384
    %v390 = vmul.f32 %v386, 1.442695
    %v391 = vpow.pop %v390
    %v392 = vmul.f32 %v387, 1.442695
    %v393 = vpow.pop %v392
    %v394 = vmul.f32 %v388, 1.442695
    %v395 = vpow.pop %v394
    %v396 = vmul.f32 %v389, 1.442695
    %v397 = vpow.pop %v396
    %v398 = vld [vmem:[%s4] sm:$0xff]
    %v399 = vld [vmem:[%s4 + $0x8] sm:$0xff]
    %v400 = vld [vmem:[%s4 + $0x10] sm:$0xff]
    %v401 = vld [vmem:[%s4 + $0x18] sm:$0xff]
    %v402 = vld [vmem:[%s4 + $0x20] sm:$0xff]
    %v403 = vld [vmem:[%s4 + $0x28] sm:$0xff]
    %v404 = vld [vmem:[%s4 + $0x30] sm:$0xff]
    %v405 = vld [vmem:[%s4 + $0x38] sm:$0xff]
    %v406 = vld [vmem:[%s4 + $0x40] sm:$0xff]
    %v407 = vld [vmem:[%s4 + $0x48] sm:$0xff]
    %v408 = vld [vmem:[%s4 + $0x50] sm:$0xff]
    %v409 = vld [vmem:[%s4 + $0x58] sm:$0xff]
    %v410 = vld [vmem:[%s4 + $0x60] sm:$0xff]
    %v411 = vld [vmem:[%s4 + $0x68] sm:$0xff]
    %v412 = vld [vmem:[%s4 + $0x70] sm:$0xff]
    %v413 = vld [vmem:[%s4 + $0x78] sm:$0xff]
    %v414 = vld [vmem:[%s4 + $0x80] sm:$0xff]
    %v415 = vld [vmem:[%s4 + $0x88] sm:$0xff]
    %v416 = vld [vmem:[%s4 + $0x90] sm:$0xff]
    %v417 = vld [vmem:[%s4 + $0x98] sm:$0xff]
    %v418 = vld [vmem:[%s4 + $0xa0] sm:$0xff]
    %v419 = vld [vmem:[%s4 + $0xa8] sm:$0xff]
    %v420 = vld [vmem:[%s4 + $0xb0] sm:$0xff]
    %v421 = vld [vmem:[%s4 + $0xb8] sm:$0xff]
    %v422 = vld [vmem:[%s4 + $0xc0] sm:$0xff]
    %v423 = vld [vmem:[%s4 + $0xc8] sm:$0xff]
    %v424 = vld [vmem:[%s4 + $0xd0] sm:$0xff]
    %v425 = vld [vmem:[%s4 + $0xd8] sm:$0xff]
    %v426 = vld [vmem:[%s4 + $0xe0] sm:$0xff]
    %v427 = vld [vmem:[%s4 + $0xe8] sm:$0xff]
    %v428 = vld [vmem:[%s4 + $0xf0] sm:$0xff]
    %v429 = vld [vmem:[%s4 + $0xf8] sm:$0xff]
    %430 = vmatpush.msra.mxu0 %v413
    %431 = vmatpush.msra.mxu0 %v412
    %432 = vmatpush.msra.mxu0 %v411
    %433 = vmatpush.msra.mxu0 %v410
    %434 = vmatpush.msra.mxu0 %v409
    %435 = vmatpush.msra.mxu0 %v408
    %436 = vmatpush.msra.mxu0 %v407
    %437 = vmatpush.msra.mxu0 %v406
    %438 = vmatpush.msra.mxu0 %v405
    %439 = vmatpush.msra.mxu0 %v404
    %440 = vmatpush.msra.mxu0 %v403
    %441 = vmatpush.msra.mxu0 %v402
    %442 = vmatpush.msra.mxu0 %v401
    %443 = vmatpush.msra.mxu0 %v400
    %444 = vmatpush.msra.mxu0 %v399
    %445 = vmatpush.msra.mxu0 %v398
    %446 = vmatmul.f32.gmra.mxu0 %v391
    %v447 = vpop.f32.mrf.mxu0
    %v448 = vadd.f32 0.0, %v447
    %449 = vmatmul.f32.gmra.mxu0 %v395
    %v450 = vpop.f32.mrf.mxu0
    %v451 = vadd.f32 0.0, %v450
    %452 = vdwg.mxu0
    %453 = vmatpush.msra.mxu0 %v429
    %454 = vmatpush.msra.mxu0 %v428
    %455 = vmatpush.msra.mxu0 %v427
    %456 = vmatpush.msra.mxu0 %v426
    %457 = vmatpush.msra.mxu0 %v425
    %458 = vmatpush.msra.mxu0 %v424
    %459 = vmatpush.msra.mxu0 %v423
    %460 = vmatpush.msra.mxu0 %v422
    %461 = vmatpush.msra.mxu0 %v421
    %462 = vmatpush.msra.mxu0 %v420
    %463 = vmatpush.msra.mxu0 %v419
    %464 = vmatpush.msra.mxu0 %v418
    %465 = vmatpush.msra.mxu0 %v417
    %466 = vmatpush.msra.mxu0 %v416
    %467 = vmatpush.msra.mxu0 %v415
    %468 = vmatpush.msra.mxu0 %v414
    %469 = vmatmul.f32.gmra.mxu0 %v393
    %v470 = vpop.f32.mrf.mxu0
    %v471 = vadd.f32 %v448, %v470
    %472 = vmatmul.f32.gmra.mxu0 %v397
    %v473 = vpop.f32.mrf.mxu0
    %v474 = vadd.f32 %v451, %v473
    %475 = vdwg.mxu0
    %v477 = vsel %vm333, %v471, 0
    %v480 = vsel %vm333, %v474, 0
    %482 = vmatpush.msra.mxu0 0.0
    %483 = vmatpush.msra.mxu0 0.0
    %484 = vmatpush.msra.mxu0 0.0
    %485 = vmatpush.msra.mxu0 0.0
    %486 = vmatpush.msra.mxu0 0.0
    %487 = vmatpush.msra.mxu0 0.0
    %488 = vmatpush.msra.mxu0 0.0
    %489 = vmatpush.msra.mxu0 0.0
    %490 = vmatpush.msra.mxu0 0.0
    %491 = vmatpush.msra.mxu0 0.0
    %492 = vmatpush.msra.mxu0 0.0
    %493 = vmatpush.msra.mxu0 0.0
    %494 = vmatpush.msra.mxu0 0.0
    %495 = vmatpush.msra.mxu0 0.0
    %496 = vmatpush.msra.mxu0 0.0
    %497 = vmatpush.msra.mxu0 %v331
    %498 = vmatmul.f32.gmra.mxu0 %v477
    %v499 = vpop.f32.mrf.mxu0
    %v500 = vadd.f32 0.0, %v499
    %501 = vmatmul.f32.gmra.mxu0 %v480
    %v502 = vpop.f32.mrf.mxu0
    %v503 = vadd.f32 0.0, %v502
    %504 = vdwg.mxu0
    %505 = vmatpush.msra.mxu0 0.0
    %506 = vmatpush.msra.mxu0 0.0
    %507 = vmatpush.msra.mxu0 0.0
    %508 = vmatpush.msra.mxu0 0.0
    %509 = vmatpush.msra.mxu0 0.0
    %510 = vmatpush.msra.mxu0 0.0
    %511 = vmatpush.msra.mxu0 0.0
    %512 = vmatpush.msra.mxu0 0.0
    %513 = vmatpush.msra.mxu0 0.0
    %514 = vmatpush.msra.mxu0 0.0
    %515 = vmatpush.msra.mxu0 0.0
    %516 = vmatpush.msra.mxu0 0.0
    %517 = vmatpush.msra.mxu0 0.0
    %518 = vmatpush.msra.mxu0 0.0
    %519 = vmatpush.msra.mxu0 0.0
    %520 = vmatpush.msra.mxu0 %v332
    %521 = vmatmul.f32.gmra.mxu0 %v477
    %v522 = vpop.f32.mrf.mxu0
    %v523 = vadd.f32 0.0, %v522
    %524 = vmatmul.f32.gmra.mxu0 %v480
    %v525 = vpop.f32.mrf.mxu0
    %v526 = vadd.f32 0.0, %v525
    %527 = vdwg.mxu0
    %v528 = vrcp.pop %v500
    %v529 = vrcp.pop %v523
    %v530 = vrcp.pop %v503
    %v531 = vrcp.pop %v526
    %v532 = vmul.f32 %v391, %v528
    %v533 = vmul.f32 %v393, %v529
    %v534 = vmul.f32 %v395, %v530
    %v535 = vmul.f32 %v397, %v531
    %v536 = vpack.c.bf16 %v534, %v532
    %v537 = vpack.c.bf16 %v535, %v533
    %v538 = vld [vmem:[%s3] sm:$0xf]
    %v539 = vld [vmem:[%s3 + $0x4] sm:$0xf]
    %v540 = vld [vmem:[%s3 + $0x8] sm:$0xf]
    %v541 = vld [vmem:[%s3 + $0xc] sm:$0xf]
    %v542 = vld [vmem:[%s3 + $0x10] sm:$0xf]
    %v543 = vld [vmem:[%s3 + $0x14] sm:$0xf]
    %v544 = vld [vmem:[%s3 + $0x18] sm:$0xf]
    %v545 = vld [vmem:[%s3 + $0x1c] sm:$0xf]
    %v546 = vld [vmem:[%s3 + $0x20] sm:$0xf]
    %v547 = vld [vmem:[%s3 + $0x24] sm:$0xf]
    %v548 = vld [vmem:[%s3 + $0x28] sm:$0xf]
    %v549 = vld [vmem:[%s3 + $0x2c] sm:$0xf]
    %v550 = vld [vmem:[%s3 + $0x30] sm:$0xf]
    %v551 = vld [vmem:[%s3 + $0x34] sm:$0xf]
    %v552 = vld [vmem:[%s3 + $0x38] sm:$0xf]
    %v553 = vld [vmem:[%s3 + $0x3c] sm:$0xf]
    %v554 = vld [vmem:[%s3 + $0x40] sm:$0xf]
    %v555 = vld [vmem:[%s3 + $0x44] sm:$0xf]
    %v556 = vld [vmem:[%s3 + $0x48] sm:$0xf]
    %v557 = vld [vmem:[%s3 + $0x4c] sm:$0xf]
    %v558 = vld [vmem:[%s3 + $0x50] sm:$0xf]
    %v559 = vld [vmem:[%s3 + $0x54] sm:$0xf]
    %v560 = vld [vmem:[%s3 + $0x58] sm:$0xf]
    %v561 = vld [vmem:[%s3 + $0x5c] sm:$0xf]
    %v562 = vld [vmem:[%s3 + $0x60] sm:$0xf]
    %v563 = vld [vmem:[%s3 + $0x64] sm:$0xf]
    %v564 = vld [vmem:[%s3 + $0x68] sm:$0xf]
    %v565 = vld [vmem:[%s3 + $0x6c] sm:$0xf]
    %v566 = vld [vmem:[%s3 + $0x70] sm:$0xf]
    %v567 = vld [vmem:[%s3 + $0x74] sm:$0xf]
    %v568 = vld [vmem:[%s3 + $0x78] sm:$0xf]
    %v569 = vld [vmem:[%s3 + $0x7c] sm:$0xf]
    %v602 = vunpack.c.l.b16 %v538
    %v603 = vunpack.c.l.b16 %v539
    %v604 = vunpack.c.l.b16 %v540
    %v605 = vunpack.c.l.b16 %v541
    %v606 = vunpack.c.l.b16 %v542
    %v607 = vunpack.c.l.b16 %v543
    %v608 = vunpack.c.l.b16 %v544
    %v609 = vunpack.c.l.b16 %v545
    %v610 = vunpack.c.l.b16 %v546
    %v611 = vunpack.c.l.b16 %v547
    %v612 = vunpack.c.l.b16 %v548
    %v613 = vunpack.c.l.b16 %v549
    %v614 = vunpack.c.l.b16 %v550
    %v615 = vunpack.c.l.b16 %v551
    %v616 = vunpack.c.l.b16 %v552
    %v617 = vunpack.c.l.b16 %v553
    %v618 = vunpack.c.l.b16 %v554
    %v619 = vunpack.c.l.b16 %v555
    %v620 = vunpack.c.l.b16 %v556
    %v621 = vunpack.c.l.b16 %v557
    %v622 = vunpack.c.l.b16 %v558
    %v623 = vunpack.c.l.b16 %v559
    %v624 = vunpack.c.l.b16 %v560
    %v625 = vunpack.c.l.b16 %v561
    %v626 = vunpack.c.l.b16 %v562
    %v627 = vunpack.c.l.b16 %v563
    %v628 = vunpack.c.l.b16 %v564
    %v629 = vunpack.c.l.b16 %v565
    %v630 = vunpack.c.l.b16 %v566
    %v631 = vunpack.c.l.b16 %v567
    %v632 = vunpack.c.l.b16 %v568
    %v633 = vunpack.c.l.b16 %v569
    %v634 = vpack.c.b16 %v603, %v602
    %v635 = vpack.c.b16 %v605, %v604
    %v636 = vpack.c.b16 %v607, %v606
    %v637 = vpack.c.b16 %v609, %v608
    %v638 = vpack.c.b16 %v611, %v610
    %v639 = vpack.c.b16 %v613, %v612
    %v640 = vpack.c.b16 %v615, %v614
    %v641 = vpack.c.b16 %v617, %v616
    %v642 = vpack.c.b16 %v619, %v618
    %v643 = vpack.c.b16 %v621, %v620
    %v644 = vpack.c.b16 %v623, %v622
    %v645 = vpack.c.b16 %v625, %v624
    %v646 = vpack.c.b16 %v627, %v626
    %v647 = vpack.c.b16 %v629, %v628
    %v648 = vpack.c.b16 %v631, %v630
    %v649 = vpack.c.b16 %v633, %v632
    %666 = vmatpush.bf16.msra.mxu0 %v641
    %667 = vmatpush.bf16.msra.mxu0 %v640
    %668 = vmatpush.bf16.msra.mxu0 %v639
    %669 = vmatpush.bf16.msra.mxu0 %v638
    %670 = vmatpush.bf16.msra.mxu0 %v637
    %671 = vmatpush.bf16.msra.mxu0 %v636
    %672 = vmatpush.bf16.msra.mxu0 %v635
    %673 = vmatpush.bf16.msra.mxu0 %v634
    %674 = vmatmul.bf16.gmra.mxu0 %v536
    %v675 = vpop.f32.mrf.mxu0
    %v676 = vadd.f32 0.0, %v675
    %v677 = vpop.f32.mrf.mxu0
    %v678 = vadd.f32 0.0, %v677
    %679 = vdwg.mxu0
    %680 = vmatpush.bf16.msra.mxu0 %v649
    %681 = vmatpush.bf16.msra.mxu0 %v648
    %682 = vmatpush.bf16.msra.mxu0 %v647
    %683 = vmatpush.bf16.msra.mxu0 %v646
    %684 = vmatpush.bf16.msra.mxu0 %v645
    %685 = vmatpush.bf16.msra.mxu0 %v644
    %686 = vmatpush.bf16.msra.mxu0 %v643
    %687 = vmatpush.bf16.msra.mxu0 %v642
    %688 = vmatmul.bf16.gmra.mxu0 %v537
    %v689 = vpop.f32.mrf.mxu0
    %v690 = vadd.f32 %v676, %v689
    %v691 = vpop.f32.mrf.mxu0
    %v692 = vadd.f32 %v678, %v691
    %693 = vdwg.mxu0
    %694 = vadd.xlane.f32.xlu0 %v690
    %v695 = vpop.xlane.xlu0 %694
    %vm696 = vcmask 1044480
    %v697 = vsel %vm696, %v692, 0.0
    %698 = vadd.xlane.f32.xlu0 %v697
    %v699 = vpop.xlane.xlu0 %698
    %v700 = vmul.f32 %v695, 0.0078125
    %v701 = vmul.f32 %v699, 0.0078125
    %v702 = vmul.f32 %v690, %v690
    %v703 = vmul.f32 %v692, %v692
    %704 = vadd.xlane.f32.xlu0 %v702
    %v705 = vpop.xlane.xlu0 %704
    %v706 = vsel %vm696, %v703, 0.0
    %707 = vadd.xlane.f32.xlu0 %v706
    %v708 = vpop.xlane.xlu0 %707
    %v709 = vmul.f32 %v705, 0.0078125
    %v710 = vmul.f32 %v708, 0.0078125
    %v711 = vmul.f32 %v700, %v700
    %v712 = vmul.f32 %v701, %v701
    %v713 = vsub.f32 %v709, %v711
    %v714 = vsub.f32 %v710, %v712
    %v715 = vmax.f32 %v713, 0.0
    %v716 = vmax.f32 %v714, 0.0
    %v717 = vsub.f32 %v690, %v700
    %v718 = vsub.f32 %v692, %v701
    %v719 = vadd.f32 %v715, 1e-05
    %v720 = vadd.f32 %v716, 1e-05
    %v721 = vrsqrt.pop %v719
    %v722 = vmul.f32 %v721, %v719
    %v723 = vmul.f32 %v722, %v721
    %v724 = vmul.f32 0.5, %v723
    %v725 = vsub.f32 1.5, %v724
    %v726 = vmul.f32 %v721, %v725
    %vm727 = vweird.f32 %v719
    %vm728 = vweird.f32 %v721
    %vm729 = vmor %vm727, %vm728
    %v730 = vsel %vm729, %v721, %v726
    %v731 = vrsqrt.pop %v720
    %v732 = vmul.f32 %v731, %v720
    %v733 = vmul.f32 %v732, %v731
    %v734 = vmul.f32 0.5, %v733
    %v735 = vsub.f32 1.5, %v734
    %v736 = vmul.f32 %v731, %v735
    %vm737 = vweird.f32 %v720
    %vm738 = vweird.f32 %v731
    %vm739 = vmor %vm737, %vm738
    %v740 = vsel %vm739, %v731, %v736
    %v741 = vmul.f32 %v717, %v730
    %v742 = vmul.f32 %v718, %v740
    %v743 = vld [vmem:[%s7] sm:$0x1]
    %v745 = vperm.slane %v743, 0
    %v747 = vmul.f32 %v741, %v745
    %v748 = vmul.f32 %v742, %v745
    %v749 = vld [vmem:[%s8] sm:$0x1]
    %v751 = vperm.slane %v749, 0
    %v753 = vadd.f32 %v747, %v751
    %v754 = vadd.f32 %v748, %v751
    %v755 = vmax.f32 %v753, 0.0
    %v756 = vmax.f32 %v754, 0.0
    %757 = vst [vmem:[#allocation2] sm:$0xff] %v755
    %758 = vst [vmem:[#allocation2 + $0x8] sm:$0x1f] %v756
    // Predicated region
    $region38: #{tpu_custom_call.1} parent=1 // pred_check
      _
    $region39: #{tpu_custom_call.1} parent=1 // pred_check_branch
      %760 = sbr.rel (0) target = $region41
    $region40: #{tpu_custom_call.1} parent=1 // pred_region
      %762 = vsyncadd [#allocation3], 0
      %s763 = sshll.u32 [#allocation2], 4
      %s764 = int_to_ptr.vmem [resolvable:$true] %s763
      %s765 = sshll.u32 %s9, 4
      %s766 = int_to_ptr.hbm [resolvable:$true] %s765
      %771 = dma.vmem_to_hbm [thread:$0]  %s764, 256, %s766, [#allocation3], 128, 128, 8
    $region41: #{tpu_custom_call.1} parent=1 // pred_fallthru
      _
    // Predicated region
    $region42: #{tpu_custom_call.1} parent=1 // pred_check
      _
    $region43: #{tpu_custom_call.1} parent=1 // pred_check_branch
      %773 = sbr.rel (0) target = $region45
    $region44: #{tpu_custom_call.1} parent=1 // pred_region
      %775 = dma.done [#allocation3], 256
    $region45: #{tpu_custom_call.1} parent=1 // pred_fallthru
      _
    %776 = vsyncpa [#allocation3], 1

</llo_original>
